<compile_context>
chip_gen: v5e
topology: v5e:2x2
jax: 0.10.0
libtpu: 0.0.40
codegen_flags: <defaults>
</compile_context>

<pallas_src>
import functools

import jax
import jax.numpy as jnp
from jax.experimental import pallas as pl
from jax.experimental.pallas import tpu as pltpu

DEFAULT_DT = 0.01
DEFAULT_RF_THETA = 1.0
DEFAULT_RF_ADAPTIVE_B_offset_a = 0.0
DEFAULT_RF_ADAPTIVE_B_offset_b = 3.0
DEFAULT_RF_ADAPTIVE_OMEGA_a = 5.0
DEFAULT_RF_ADAPTIVE_OMEGA_b = 10.0


def _round_up(x, m):
    return (x + m - 1) // m * m


# ---------------------------------------------------------------------------
# Kernel 1: hoisted input projection  in_dt = (x @ W^T) * dt  for all steps.
# ---------------------------------------------------------------------------
def _rf_projection_kernel(x_ref, w_ref, o_ref, *, dt):
    # bf16 operands, f32 MXU accumulation; dt folded in here so the recurrence
    # never multiplies by dt.
    o_ref[...] = jnp.dot(x_ref[...], w_ref[...],
                         preferred_element_type=jnp.float32) * dt


def _project_all_steps(x_flat, w_t_p, dt, row_tile):
    """x_flat: [M, I] bf16 (M = T*B_pad); w_t_p: [I, Lp] bf16 -> [Mp, Lp] f32."""
    M, I = x_flat.shape
    Lp = w_t_p.shape[1]
    tm = min(M, row_tile)
    Mp = _round_up(M, tm)
    if Mp != M:
        x_flat = jnp.pad(x_flat, ((0, Mp - M), (0, 0)))
    return pl.pallas_call(
        functools.partial(_rf_projection_kernel, dt=dt),
        out_shape=jax.ShapeDtypeStruct((Mp, Lp), jnp.float32),
        grid=(Mp // tm,),
        in_specs=[
            pl.BlockSpec((tm, I), lambda i: (i, 0)),
            pl.BlockSpec((I, Lp), lambda i: (0, 0)),   # W^T resident across tiles
        ],
        out_specs=pl.BlockSpec((tm, Lp), lambda i: (i, 0)),
        compiler_params=pltpu.CompilerParams(
            dimension_semantics=("parallel",)),
    )(x_flat, w_t_p)


# ---------------------------------------------------------------------------
# Kernel 2: VPU-only recurrence over time; u/v resident in VMEM output blocks.
# ---------------------------------------------------------------------------
def _rf_recurrence_kernel(in_ref, u0_ref, v0_ref, om_ref, b_ref,
                          z_ref, u_ref, v_ref, *, theta):
    t = pl.program_id(0)

    @pl.when(t == 0)
    def _():
        u_ref[...] = u0_ref[...]
        v_ref[...] = v0_ref[...]

    u = u_ref[...]            # state carried in the VMEM-resident output block
    v = v_ref[...]
    om_dt = om_ref[...]       # (1, Lp): |omega| * dt, broadcasts over batch
    b_dt = b_ref[...]         # (1, Lp): |b_offset| * dt  ( == -b*dt )
    in_dt = in_ref[...]       # (Bp, Lp): (x_t @ W^T) * dt

    u_new = u + b_dt + in_dt - om_dt * v
    v_new = v + om_dt * u + b_dt

    z_ref[...] = jnp.where(u_new > theta, 1.0, 0.0).astype(z_ref.dtype)
    u_ref[...] = u_new
    v_ref[...] = v_new


def rf_cell_sequence(x_seq, state0, w, omega, b_offset,
                     dt=DEFAULT_DT, theta=DEFAULT_RF_THETA):
    """Apply the RFCell forward over a whole sequence in one fused pass.

    x_seq: [T, B, I]; state0 = (z0, u0, v0) each [B, L]; w: [L, I] (torch
    layout); omega, b_offset: [L].
    Returns (z_seq [T, B, L] bf16 with exact {0,1} values,
             u_final [B, L] f32, v_final [B, L] f32).
    """
    _, u0, v0 = state0        # z0 unused by the forward (matches PyTorch)
    T, B, I = x_seq.shape
    L = w.shape[0]
    Bp = _round_up(B, 16)     # sublane-aligned batch (16 => native bf16 tiling)
    Lp = _round_up(L, 128)    # lane-dense layer axis

    # Parameters: transpose / pad / cast once (hoist to load time in real use).
    w_t_p = jnp.pad(w.T.astype(jnp.bfloat16), ((0, 0), (0, Lp - L)))
    om_dt = jnp.pad(jnp.abs(omega).astype(jnp.float32) * dt,
                    (0, Lp - L)).reshape(1, Lp)
    b_dt = jnp.pad(jnp.abs(b_offset).astype(jnp.float32) * dt,
                   (0, Lp - L)).reshape(1, Lp)

    x_flat = jnp.pad(x_seq.astype(jnp.bfloat16),
                     ((0, 0), (0, Bp - B), (0, 0))).reshape(T * Bp, I)
    u0_p = jnp.pad(u0.astype(jnp.float32), ((0, Bp - B), (0, Lp - L)))
    v0_p = jnp.pad(v0.astype(jnp.float32), ((0, Bp - B), (0, Lp - L)))

    # Phase 1: one big bf16 matmul for every timestep (state-independent).
    row_tile = Bp * min(T, max(1, 1024 // Bp))
    in_dt = _project_all_steps(x_flat, w_t_p, dt, row_tile)  # [>=T*Bp, Lp] f32

    # Phase 2: sequential recurrence over T; u/v stay in VMEM the whole time.
    kernel = functools.partial(_rf_recurrence_kernel, theta=theta)
    z_p, u_f, v_f = pl.pallas_call(
        kernel,
        out_shape=(
            jax.ShapeDtypeStruct((T * Bp, Lp), jnp.bfloat16),  # z (0/1 mask)
            jax.ShapeDtypeStruct((Bp, Lp), jnp.float32),       # final u
            jax.ShapeDtypeStruct((Bp, Lp), jnp.float32),       # final v
        ),
        grid=(T,),
        in_specs=[
            pl.BlockSpec((Bp, Lp), lambda t: (t, 0)),   # in_dt for step t
            pl.BlockSpec((Bp, Lp), lambda t: (0, 0)),   # u0 (read at t == 0)
            pl.BlockSpec((Bp, Lp), lambda t: (0, 0)),   # v0 (read at t == 0)
            pl.BlockSpec((1, Lp), lambda t: (0, 0)),    # |omega| * dt
            pl.BlockSpec((1, Lp), lambda t: (0, 0)),    # |b_offset| * dt
        ],
        out_specs=(
            pl.BlockSpec((Bp, Lp), lambda t: (t, 0)),   # z_t
            pl.BlockSpec((Bp, Lp), lambda t: (0, 0)),   # u (VMEM-resident carry)
            pl.BlockSpec((Bp, Lp), lambda t: (0, 0)),   # v (VMEM-resident carry)
        ),
        input_output_aliases={1: 1, 2: 2},              # in-place u/v state
        compiler_params=pltpu.CompilerParams(
            dimension_semantics=("arbitrary",)),        # time axis is sequential
    )(in_dt, u0_p, v0_p, om_dt, b_dt)

    z_seq = z_p.reshape(T, Bp, Lp)[:, :B, :L]
    return z_seq, u_f[:B, :L], v_f[:B, :L]


def rf_cell_forward(x, state, w, omega, b_offset,
                    dt=DEFAULT_DT, theta=DEFAULT_RF_THETA):
    """Single-step forward matching RFCell.forward(x, state) -> (z, u, v)."""
    z_seq, u, v = rf_cell_sequence(x[None], state, w, omega, b_offset,
                                   dt=dt, theta=theta)
    return z_seq[0], u, v


# ---------------------------------------------------------------------------
# Pure-JAX reference: step-by-step loop mirroring the PyTorch module.
# ---------------------------------------------------------------------------
def _reference_sequence(x_seq, state0, w, omega, b_offset,
                        dt=DEFAULT_DT, theta=DEFAULT_RF_THETA):
    """Uses the same bf16 input quantization for the matmul as the kernel."""
    _, u, v = state0
    om = jnp.abs(omega)[None, :]
    b = -jnp.abs(b_offset)[None, :]
    w_t = w.T.astype(jnp.bfloat16)
    zs, us = [], []
    for t in range(x_seq.shape[0]):
        in_sum = jnp.dot(x_seq[t].astype(jnp.bfloat16), w_t,
                         preferred_element_type=jnp.float32)
        u_new = u - b * dt - om * v * dt + in_sum * dt
        v = v + om * u * dt - b * dt        # uses OLD u (matches rf_update_linear)
        u = u_new
        zs.append((u_new - theta > 0.0).astype(jnp.float32))
        us.append(u_new)
    return jnp.stack(zs), jnp.stack(us), u, v


if __name__ == "__main__":
    key = jax.random.PRNGKey(0)
    k_x, k_w, k_u, k_v, k_om, k_b = jax.random.split(key, 6)

    seq_len = 8
    batch = 8
    input_size = 32
    layer_size = 64

    # Deterministic parameter init (mirrors RFCell.__init__):
    limit = (6.0 / (input_size + layer_size)) ** 0.5     # xavier_uniform_
    w = jax.random.uniform(k_w, (layer_size, input_size),
                           minval=-limit, maxval=limit, dtype=jnp.float32)
    omega = jax.random.uniform(k_om, (layer_size,),
                               minval=DEFAULT_RF_ADAPTIVE_OMEGA_a,
                               maxval=DEFAULT_RF_ADAPTIVE_OMEGA_b,
                               dtype=jnp.float32)
    b_offset = jax.random.uniform(k_b, (layer_size,),
                                  minval=DEFAULT_RF_ADAPTIVE_B_offset_a,
                                  maxval=DEFAULT_RF_ADAPTIVE_B_offset_b,
                                  dtype=jnp.float32)

    # Inputs / initial state.
    x_seq = jax.random.normal(k_x, (seq_len, batch, input_size), jnp.float32)
    u0 = 0.5 * jax.random.normal(k_u, (batch, layer_size), jnp.float32)
    v0 = 0.5 * jax.random.normal(k_v, (batch, layer_size), jnp.float32)
    z0 = jnp.zeros((batch, layer_size), jnp.float32)
    state0 = (z0, u0, v0)

    seq_fn = jax.jit(rf_cell_sequence, static_argnames=("dt", "theta"))
    z_seq, u_f, v_f = seq_fn(x_seq, state0, w, omega, b_offset)
    jax.block_until_ready((z_seq, u_f, v_f))

    z_ref, u_hist_ref, u_ref, v_ref = _reference_sequence(
        x_seq, state0, w, omega, b_offset)

    assert jnp.allclose(u_f, u_ref, atol=1e-4), "u mismatch"
    assert jnp.allclose(v_f, v_ref, atol=1e-4), "v mismatch"
    # z is a hard threshold: ignore elements that sit numerically on theta.
    near_threshold = jnp.abs(u_hist_ref - DEFAULT_RF_THETA) < 1e-4
    z_match = (z_seq.astype(jnp.float32) == z_ref) | near_threshold
    assert bool(jnp.all(z_match)), "z mismatch"

    print("KERNEL_OK")
</pallas_src>

<mosaic_0001>
module attributes {stable_mosaic.version = 11 : i64} {
  func.func @_rf_projection_kernel(%arg0: i32, %arg1: memref<128x32xbf16, #tpu.memory_space<vmem>>, %arg2: memref<32x128xbf16, #tpu.memory_space<vmem>>, %arg3: memref<128x128xf32, #tpu.memory_space<vmem>>) attributes {dimension_semantics = [#tpu.dimension_semantics<parallel>], iteration_bounds = array<i64: 1>, scalar_prefetch = 0 : i64, scratch_operands = 0 : i64, tpu.core_type = #tpu.core_type<tc>, window_params = [{transform_indices = @transform_0, window_bounds = array<i64: 128, 32>}, {pipeline_mode = #tpu.pipeline_mode<synchronous>, transform_indices = @transform_1, window_bounds = array<i64: 32, 128>}, {transform_indices = @transform_2, window_bounds = array<i64: 128, 128>}]} {
    %c0 = arith.constant 0 : index
    %c0_0 = arith.constant 0 : index
    %0 = vector.load %arg1[%c0, %c0_0] : memref<128x32xbf16, #tpu.memory_space<vmem>>, vector<128x32xbf16>
    %c0_1 = arith.constant 0 : index
    %c0_2 = arith.constant 0 : index
    %1 = vector.load %arg2[%c0_1, %c0_2] : memref<32x128xbf16, #tpu.memory_space<vmem>>, vector<32x128xbf16>
    %cst = arith.constant dense<0.000000e+00> : vector<128x128xf32>
    %2 = tpu.matmul %0, %1, %cst {dimension_numbers = #tpu.dot_dimension_numbers<[1], [0], [0], [1], [0, 0, 1, 1], [], []>} : vector<128x32xbf16>, vector<32x128xbf16>, vector<128x128xf32> -> vector<128x128xf32>
    %cst_3 = arith.constant 0.00999999977 : f32
    %3 = vector.broadcast %cst_3 : f32 to vector<128x128xf32>
    %4 = arith.mulf %2, %3 : vector<128x128xf32>
    %c0_4 = arith.constant 0 : index
    %c0_5 = arith.constant 0 : index
    %5 = vector.load %arg3[%c0_4, %c0_5] : memref<128x128xf32, #tpu.memory_space<vmem>>, vector<128x128xf32>
    tpu.vector_store %arg3[%c0_4, %c0_5], %4 {strides = array<i32>} : memref<128x128xf32, #tpu.memory_space<vmem>>, vector<128x128xf32>,
    return
  }
  func.func @transform_0(%arg0: i32) -> (i32, i32) {
    %c0_i32 = arith.constant 0 : i32
    %c0_i32_0 = arith.constant 0 : i32
    return %arg0, %c0_i32 : i32, i32
  }
  func.func @transform_1(%arg0: i32) -> (i32, i32) {
    %c0_i32 = arith.constant 0 : i32
    %c0_i32_0 = arith.constant 0 : i32
    %c0_i32_1 = arith.constant 0 : i32
    return %c0_i32, %c0_i32_0 : i32, i32
  }
  func.func @transform_2(%arg0: i32) -> (i32, i32) {
    %c0_i32 = arith.constant 0 : i32
    %c0_i32_0 = arith.constant 0 : i32
    return %arg0, %c0_i32 : i32, i32
  }
}

module attributes {stable_mosaic.version = 11 : i64} {
  func.func @_rf_recurrence_kernel(%arg0: i32, %arg1: memref<16x128xf32, #tpu.memory_space<vmem>>, %arg2: memref<16x128xf32, #tpu.memory_space<vmem>>, %arg3: memref<16x128xf32, #tpu.memory_space<vmem>>, %arg4: memref<1x128xf32, #tpu.memory_space<vmem>>, %arg5: memref<1x128xf32, #tpu.memory_space<vmem>>, %arg6: memref<16x128xbf16, #tpu.memory_space<vmem>>, %arg7: memref<16x128xf32, #tpu.memory_space<vmem>>, %arg8: memref<16x128xf32, #tpu.memory_space<vmem>>) attributes {dimension_semantics = [#tpu.dimension_semantics<arbitrary>], iteration_bounds = array<i64: 8>, scalar_prefetch = 0 : i64, scratch_operands = 0 : i64, tpu.core_type = #tpu.core_type<tc>, window_params = [{transform_indices = @transform_0, window_bounds = array<i64: 16, 128>}, {pipeline_mode = #tpu.pipeline_mode<synchronous>, transform_indices = @transform_1, window_bounds = array<i64: 16, 128>}, {pipeline_mode = #tpu.pipeline_mode<synchronous>, transform_indices = @transform_2, window_bounds = array<i64: 16, 128>}, {pipeline_mode = #tpu.pipeline_mode<synchronous>, transform_indices = @transform_3, window_bounds = array<i64: 1, 128>}, {pipeline_mode = #tpu.pipeline_mode<synchronous>, transform_indices = @transform_4, window_bounds = array<i64: 1, 128>}, {transform_indices = @transform_5, window_bounds = array<i64: 16, 128>}, {pipeline_mode = #tpu.pipeline_mode<synchronous>, transform_indices = @transform_6, window_bounds = array<i64: 16, 128>}, {pipeline_mode = #tpu.pipeline_mode<synchronous>, transform_indices = @transform_7, window_bounds = array<i64: 16, 128>}]} {
    %c0_i32 = arith.constant 0 : i32
    %0 = arith.cmpi eq, %arg0, %c0_i32 : i32
    %1 = arith.extui %0 : i1 to i32
    %c0_i32_0 = arith.constant 0 : i32
    %2 = arith.cmpi ne, %1, %c0_i32_0 : i32
    scf.if %2 {
      %c0_18 = arith.constant 0 : index
      %c0_19 = arith.constant 0 : index
      %28 = vector.load %arg2[%c0_18, %c0_19] : memref<16x128xf32, #tpu.memory_space<vmem>>, vector<16x128xf32>
      %c0_20 = arith.constant 0 : index
      %c0_21 = arith.constant 0 : index
      %29 = vector.load %arg7[%c0_20, %c0_21] : memref<16x128xf32, #tpu.memory_space<vmem>>, vector<16x128xf32>
      tpu.vector_store %arg7[%c0_20, %c0_21], %28 {strides = array<i32>} : memref<16x128xf32, #tpu.memory_space<vmem>>, vector<16x128xf32>,
      %c0_22 = arith.constant 0 : index
      %c0_23 = arith.constant 0 : index
      %30 = vector.load %arg3[%c0_22, %c0_23] : memref<16x128xf32, #tpu.memory_space<vmem>>, vector<16x128xf32>
      %c0_24 = arith.constant 0 : index
      %c0_25 = arith.constant 0 : index
      %31 = vector.load %arg8[%c0_24, %c0_25] : memref<16x128xf32, #tpu.memory_space<vmem>>, vector<16x128xf32>
      tpu.vector_store %arg8[%c0_24, %c0_25], %30 {strides = array<i32>} : memref<16x128xf32, #tpu.memory_space<vmem>>, vector<16x128xf32>,
    } else {
    }
    %c0 = arith.constant 0 : index
    %c0_1 = arith.constant 0 : index
    %3 = vector.load %arg7[%c0, %c0_1] : memref<16x128xf32, #tpu.memory_space<vmem>>, vector<16x128xf32>
    %c0_2 = arith.constant 0 : index
    %c0_3 = arith.constant 0 : index
    %4 = vector.load %arg8[%c0_2, %c0_3] : memref<16x128xf32, #tpu.memory_space<vmem>>, vector<16x128xf32>
    %c0_4 = arith.constant 0 : index
    %c0_5 = arith.constant 0 : index
    %5 = vector.load %arg4[%c0_4, %c0_5] : memref<1x128xf32, #tpu.memory_space<vmem>>, vector<1x128xf32>
    %c0_6 = arith.constant 0 : index
    %c0_7 = arith.constant 0 : index
    %6 = vector.load %arg5[%c0_6, %c0_7] : memref<1x128xf32, #tpu.memory_space<vmem>>, vector<1x128xf32>
    %c0_8 = arith.constant 0 : index
    %c0_9 = arith.constant 0 : index
    %7 = vector.load %arg1[%c0_8, %c0_9] : memref<16x128xf32, #tpu.memory_space<vmem>>, vector<16x128xf32>
    %8 = vector.broadcast %6 : vector<1x128xf32> to vector<16x128xf32>
    %9 = arith.addf %3, %8 : vector<16x128xf32>
    %10 = arith.addf %9, %7 : vector<16x128xf32>
    %11 = vector.broadcast %5 : vector<1x128xf32> to vector<16x128xf32>
    %12 = arith.mulf %11, %4 : vector<16x128xf32>
    %13 = arith.subf %10, %12 : vector<16x128xf32>
    %14 = vector.broadcast %5 : vector<1x128xf32> to vector<16x128xf32>
    %15 = arith.mulf %14, %3 : vector<16x128xf32>
    %16 = arith.addf %4, %15 : vector<16x128xf32>
    %17 = vector.broadcast %6 : vector<1x128xf32> to vector<16x128xf32>
    %18 = arith.addf %16, %17 : vector<16x128xf32>
    %cst = arith.constant 1.000000e+00 : f32
    %19 = vector.broadcast %cst : f32 to vector<16x128xf32>
    %20 = arith.cmpf ogt, %13, %19 : vector<16x128xf32>
    %cst_10 = arith.constant 1.000000e+00 : f32
    %cst_11 = arith.constant 0.000000e+00 : f32
    %21 = vector.broadcast %cst_10 : f32 to vector<16x128xf32>
    %22 = vector.broadcast %cst_11 : f32 to vector<16x128xf32>
    %23 = arith.select %20, %21, %22 : vector<16x128xi1>, vector<16x128xf32>
    %24 = arith.truncf %23 : vector<16x128xf32> to vector<16x128xbf16>
    %c0_12 = arith.constant 0 : index
    %c0_13 = arith.constant 0 : index
    %25 = vector.load %arg6[%c0_12, %c0_13] : memref<16x128xbf16, #tpu.memory_space<vmem>>, vector<16x128xbf16>
    tpu.vector_store %arg6[%c0_12, %c0_13], %24 {strides = array<i32>} : memref<16x128xbf16, #tpu.memory_space<vmem>>, vector<16x128xbf16>,
    %c0_14 = arith.constant 0 : index
    %c0_15 = arith.constant 0 : index
    %26 = vector.load %arg7[%c0_14, %c0_15] : memref<16x128xf32, #tpu.memory_space<vmem>>, vector<16x128xf32>
    tpu.vector_store %arg7[%c0_14, %c0_15], %13 {strides = array<i32>} : memref<16x128xf32, #tpu.memory_space<vmem>>, vector<16x128xf32>,
    %c0_16 = arith.constant 0 : index
    %c0_17 = arith.constant 0 : index
    %27 = vector.load %arg8[%c0_16, %c0_17] : memref<16x128xf32, #tpu.memory_space<vmem>>, vector<16x128xf32>
    tpu.vector_store %arg8[%c0_16, %c0_17], %18 {strides = array<i32>} : memref<16x128xf32, #tpu.memory_space<vmem>>, vector<16x128xf32>,
    return
  }
  func.func @transform_0(%arg0: i32) -> (i32, i32) {
    %c0_i32 = arith.constant 0 : i32
    %c0_i32_0 = arith.constant 0 : i32
    return %arg0, %c0_i32 : i32, i32
  }
  func.func @transform_1(%arg0: i32) -> (i32, i32) {
    %c0_i32 = arith.constant 0 : i32
    %c0_i32_0 = arith.constant 0 : i32
    %c0_i32_1 = arith.constant 0 : i32
    return %c0_i32, %c0_i32_0 : i32, i32
  }
  func.func @transform_2(%arg0: i32) -> (i32, i32) {
    %c0_i32 = arith.constant 0 : i32
    %c0_i32_0 = arith.constant 0 : i32
    %c0_i32_1 = arith.constant 0 : i32
    return %c0_i32, %c0_i32_0 : i32, i32
  }
  func.func @transform_3(%arg0: i32) -> (i32, i32) {
    %c0_i32 = arith.constant 0 : i32
    %c0_i32_0 = arith.constant 0 : i32
    %c0_i32_1 = arith.constant 0 : i32
    return %c0_i32, %c0_i32_0 : i32, i32
  }
  func.func @transform_4(%arg0: i32) -> (i32, i32) {
    %c0_i32 = arith.constant 0 : i32
    %c0_i32_0 = arith.constant 0 : i32
    %c0_i32_1 = arith.constant 0 : i32
    return %c0_i32, %c0_i32_0 : i32, i32
  }
  func.func @transform_5(%arg0: i32) -> (i32, i32) {
    %c0_i32 = arith.constant 0 : i32
    %c0_i32_0 = arith.constant 0 : i32
    return %arg0, %c0_i32 : i32, i32
  }
  func.func @transform_6(%arg0: i32) -> (i32, i32) {
    %c0_i32 = arith.constant 0 : i32
    %c0_i32_0 = arith.constant 0 : i32
    %c0_i32_1 = arith.constant 0 : i32
    return %c0_i32, %c0_i32_0 : i32, i32
  }
  func.func @transform_7(%arg0: i32) -> (i32, i32) {
    %c0_i32 = arith.constant 0 : i32
    %c0_i32_0 = arith.constant 0 : i32
    %c0_i32_1 = arith.constant 0 : i32
    return %c0_i32, %c0_i32_0 : i32, i32
  }
}

</mosaic_0001>

<llo_original>
// kernel: rf_cell_sequence.3
$region0: #{rf_cell_sequence.3}
  #allocation0 [shape = 'u32[]', space=smem, size = 0x4, offset = 0x4, fixed_abs, tag = 'smem constant byte address 0x4 - core index']
  #allocation1 [shape = 'u32[72,128]{1,0:T(1,128)}', space=vmem, size = 0x9000, scoped, tag = 'internal scratch']
  %s0 = inlined_call_operand.vmem [shape: f32[128,128], index: 0, kind: input, shape index: {}]
  %s1 = inlined_call_operand.vmem [shape: f32[16,128], index: 1, kind: input, shape index: {}, may-alias: {1,6}]
  %s2 = inlined_call_operand.vmem [shape: f32[16,128], index: 2, kind: input, shape index: {}, may-alias: {2,7}]
  %s3 = inlined_call_operand.vmem [shape: f32[1,128], index: 3, kind: input, shape index: {}]
  %s4 = inlined_call_operand.vmem [shape: f32[1,128], index: 4, kind: input, shape index: {}]
  %s5 = inlined_call_operand.vmem [shape: bf16[128,128], index: 5, kind: output, shape index: {0}]
  %s6 = inlined_call_operand.vmem [shape: f32[16,128], index: 6, kind: output, shape index: {1}, may-alias: {1,6}]
  %s7 = inlined_call_operand.vmem [shape: f32[16,128], index: 7, kind: output, shape index: {2}, may-alias: {2,7}]
  %8 = xla_tuple %s5, %s6, %s7
  %s9 = sld [smem:[#allocation0]]
  $region73: #{rf_cell_sequence.3} parent=0
    _
  %s11 = ssub.s32 1, %s9
  %s12 = scalar_select 0, %s11, %s9
  loop: start=0, step=1, limit=10
  $region2: #{rf_cell_sequence.3} parent=0 // loop_pre_header
    _
  $region3: #{rf_cell_sequence.3} parent=0 // loop_header
    %s14 = sphi 0, %s18
    %p15 = scmp.ge.s32.totalorder %s14, 10
    %s24 = sphi 0, %s26
    %s27 = sphi 0, %s24
    %s28 = sphi 0, %s27
    %s44 = sphi 0, %s28
    %s48 = sphi 0, %s48
    %s50 = sphi 0, %s48
    %s51 = sphi 0, %s50
    %s65 = sphi 0, %s51
    %s69 = sphi 0, %s69
    %s71 = sphi 0, %s69
    %s72 = sphi 0, %s71
    %s86 = sphi 0, %s72
    %s90 = sphi 0, %s90
    %s92 = sphi 0, %s90
    %s93 = sphi 0, %s92
    %s107 = sphi 0, %s93
    %s111 = sphi 0, %s111
    %s113 = sphi 0, %s111
    %s114 = sphi 0, %s113
    %s128 = sphi 0, %s114
    %s134 = sphi 0, %s136
    %s137 = sphi 0, %s134
    %s138 = sphi 0, %s137
    %s154 = sphi 0, %s138
    %s158 = sphi 0, %s158
    %s160 = sphi 0, %s158
    %s161 = sphi 0, %s160
    %s175 = sphi 0, %s161
    %s179 = sphi 0, %s179
    %s181 = sphi 0, %s179
    %s182 = sphi 0, %s181
    %s196 = sphi 0, %s182
  $region4: #{rf_cell_sequence.3} parent=0 // loop_header_branch
    %17 = sbr.rel (%p15) target = $region8
  $region5: #{rf_cell_sequence.3} parent=0 // loop_body
    %s19 = ssub.s32 %s14, 1
    %s20 = ssub.s32 %s14, 2
    %s21 = sadd.s32 %s14, 1
    %s22 = ssub.s32 %s14, %s21
    %p23 = scmp.eq.s32.totalorder %s22, 0
    %s25 = sadd.s32 %s24, 1
    %s26 = scalar_select %p23, %s24, %s25
    %p29 = pneg %p23
    %p30 = scmp.eq.s32.totalorder %s14, 7
    %p31 = por %p29, %p30
    %p32 = scmp.ne.s32.totalorder %s24, %s27
    %p33 = scmp.eq.s32.totalorder %s14, 0
    %p34 = por %p32, %p33
    %p35 = scmp.ne.s32.totalorder %s24, %s27
    %p36 = scmp.eq.s32.totalorder %s19, 7
    %p37 = por %p35, %p36
    %p38 = scmp.ne.s32.totalorder %s27, %s28
    %p39 = scmp.eq.s32.totalorder %s19, 0
    %p40 = por %p38, %p39
    %p41 = scmp.ne.s32.totalorder %s27, %s28
    %p42 = scmp.eq.s32.totalorder %s20, 7
    %p43 = por %p41, %p42
    %p45 = scmp.ne.s32.totalorder %s28, %s44
    %p46 = scmp.eq.s32.totalorder %s20, 0
    %p47 = por %p45, %p46
    %s49 = sadd.s32 %s48, 1
    %p52 = scmp.eq.s32.totalorder %s14, 7
    %p53 = scmp.ne.s32.totalorder %s48, %s50
    %p54 = scmp.eq.s32.totalorder %s14, 0
    %p55 = por %p53, %p54
    %p56 = scmp.ne.s32.totalorder %s48, %s50
    %p57 = scmp.eq.s32.totalorder %s19, 7
    %p58 = por %p56, %p57
    %p59 = scmp.ne.s32.totalorder %s50, %s51
    %p60 = scmp.eq.s32.totalorder %s19, 0
    %p61 = por %p59, %p60
    %p62 = scmp.ne.s32.totalorder %s50, %s51
    %p63 = scmp.eq.s32.totalorder %s20, 7
    %p64 = por %p62, %p63
    %p66 = scmp.ne.s32.totalorder %s51, %s65
    %p67 = scmp.eq.s32.totalorder %s20, 0
    %p68 = por %p66, %p67
    %s70 = sadd.s32 %s69, 1
    %p73 = scmp.eq.s32.totalorder %s14, 7
    %p74 = scmp.ne.s32.totalorder %s69, %s71
    %p75 = scmp.eq.s32.totalorder %s14, 0
    %p76 = por %p74, %p75
    %p77 = scmp.ne.s32.totalorder %s69, %s71
    %p78 = scmp.eq.s32.totalorder %s19, 7
    %p79 = por %p77, %p78
    %p80 = scmp.ne.s32.totalorder %s71, %s72
    %p81 = scmp.eq.s32.totalorder %s19, 0
    %p82 = por %p80, %p81
    %p83 = scmp.ne.s32.totalorder %s71, %s72
    %p84 = scmp.eq.s32.totalorder %s20, 7
    %p85 = por %p83, %p84
    %p87 = scmp.ne.s32.totalorder %s72, %s86
    %p88 = scmp.eq.s32.totalorder %s20, 0
    %p89 = por %p87, %p88
    %s91 = sadd.s32 %s90, 1
    %p94 = scmp.eq.s32.totalorder %s14, 7
    %p95 = scmp.ne.s32.totalorder %s90, %s92
    %p96 = scmp.eq.s32.totalorder %s14, 0
    %p97 = por %p95, %p96
    %p98 = scmp.ne.s32.totalorder %s90, %s92
    %p99 = scmp.eq.s32.totalorder %s19, 7
    %p100 = por %p98, %p99
    %p101 = scmp.ne.s32.totalorder %s92, %s93
    %p102 = scmp.eq.s32.totalorder %s19, 0
    %p103 = por %p101, %p102
    %p104 = scmp.ne.s32.totalorder %s92, %s93
    %p105 = scmp.eq.s32.totalorder %s20, 7
    %p106 = por %p104, %p105
    %p108 = scmp.ne.s32.totalorder %s93, %s107
    %p109 = scmp.eq.s32.totalorder %s20, 0
    %p110 = por %p108, %p109
    %s112 = sadd.s32 %s111, 1
    %p115 = scmp.eq.s32.totalorder %s14, 7
    %p116 = scmp.ne.s32.totalorder %s111, %s113
    %p117 = scmp.eq.s32.totalorder %s14, 0
    %p118 = por %p116, %p117
    %p119 = scmp.ne.s32.totalorder %s111, %s113
    %p120 = scmp.eq.s32.totalorder %s19, 7
    %p121 = por %p119, %p120
    %p122 = scmp.ne.s32.totalorder %s113, %s114
    %p123 = scmp.eq.s32.totalorder %s19, 0
    %p124 = por %p122, %p123
    %p125 = scmp.ne.s32.totalorder %s113, %s114
    %p126 = scmp.eq.s32.totalorder %s20, 7
    %p127 = por %p125, %p126
    %p129 = scmp.ne.s32.totalorder %s114, %s128
    %p130 = scmp.eq.s32.totalorder %s20, 0
    %p131 = por %p129, %p130
    %s132 = ssub.s32 %s14, %s21
    %p133 = scmp.eq.s32.totalorder %s132, 0
    %s135 = sadd.s32 %s134, 1
    %s136 = scalar_select %p133, %s134, %s135
    %p139 = pneg %p133
    %p140 = scmp.eq.s32.totalorder %s14, 7
    %p141 = por %p139, %p140
    %p142 = scmp.ne.s32.totalorder %s134, %s137
    %p143 = scmp.eq.s32.totalorder %s14, 0
    %p144 = por %p142, %p143
    %p145 = scmp.ne.s32.totalorder %s134, %s137
    %p146 = scmp.eq.s32.totalorder %s19, 7
    %p147 = por %p145, %p146
    %p148 = scmp.ne.s32.totalorder %s137, %s138
    %p149 = scmp.eq.s32.totalorder %s19, 0
    %p150 = por %p148, %p149
    %p151 = scmp.ne.s32.totalorder %s137, %s138
    %p152 = scmp.eq.s32.totalorder %s20, 7
    %p153 = por %p151, %p152
    %p155 = scmp.ne.s32.totalorder %s138, %s154
    %p156 = scmp.eq.s32.totalorder %s20, 0
    %p157 = por %p155, %p156
    %s159 = sadd.s32 %s158, 1
    %p162 = scmp.eq.s32.totalorder %s14, 7
    %p163 = scmp.ne.s32.totalorder %s158, %s160
    %p164 = scmp.eq.s32.totalorder %s14, 0
    %p165 = por %p163, %p164
    %p166 = scmp.ne.s32.totalorder %s158, %s160
    %p167 = scmp.eq.s32.totalorder %s19, 7
    %p168 = por %p166, %p167
    %p169 = scmp.ne.s32.totalorder %s160, %s161
    %p170 = scmp.eq.s32.totalorder %s19, 0
    %p171 = por %p169, %p170
    %p172 = scmp.ne.s32.totalorder %s160, %s161
    %p173 = scmp.eq.s32.totalorder %s20, 7
    %p174 = por %p172, %p173
    %p176 = scmp.ne.s32.totalorder %s161, %s175
    %p177 = scmp.eq.s32.totalorder %s20, 0
    %p178 = por %p176, %p177
    %s180 = sadd.s32 %s179, 1
    %p183 = scmp.eq.s32.totalorder %s14, 7
    %p184 = scmp.ne.s32.totalorder %s179, %s181
    %p185 = scmp.eq.s32.totalorder %s14, 0
    %p186 = por %p184, %p185
    %p187 = scmp.ne.s32.totalorder %s179, %s181
    %p188 = scmp.eq.s32.totalorder %s19, 7
    %p189 = por %p187, %p188
    %p190 = scmp.ne.s32.totalorder %s181, %s182
    %p191 = scmp.eq.s32.totalorder %s19, 0
    %p192 = por %p190, %p191
    %p193 = scmp.ne.s32.totalorder %s181, %s182
    %p194 = scmp.eq.s32.totalorder %s20, 7
    %p195 = por %p193, %p194
    %p197 = scmp.ne.s32.totalorder %s182, %s196
    %p198 = scmp.eq.s32.totalorder %s20, 0
    %p199 = por %p197, %p198
    %p200 = scmp.le.s32.totalorder 1, %s14
    %p201 = scmp.lt.s32.totalorder %s14, 9
    %p202 = pnand %p200, %p201
    %p203 = pneg %p202
    // Predicated region
    $region9: #{rf_cell_sequence.3} parent=5 // pred_check
      _
    $region10: #{rf_cell_sequence.3} parent=5 // pred_check_branch
      %205 = sbr.rel (%p202) target = $region12
    $region11: #{rf_cell_sequence.3} parent=5 // pred_region
      %s206 = ssub.s32 %s14, 1
      // Predicated region
      $region13: #{rf_cell_sequence.3} parent=11 // pred_check
        %p207 = pneg %p61
      $region14: #{rf_cell_sequence.3} parent=11 // pred_check_branch
        %209 = sbr.rel (%p207) target = $region16
      $region15: #{rf_cell_sequence.3} parent=11 // pred_region
        _
      $region16: #{rf_cell_sequence.3} parent=11 // pred_fallthru
        _
      // Predicated region
      $region17: #{rf_cell_sequence.3} parent=11 // pred_check
        %p210 = pneg %p82
      $region18: #{rf_cell_sequence.3} parent=11 // pred_check_branch
        %212 = sbr.rel (%p210) target = $region20
      $region19: #{rf_cell_sequence.3} parent=11 // pred_region
        _
      $region20: #{rf_cell_sequence.3} parent=11 // pred_fallthru
        _
      // Predicated region
      $region21: #{rf_cell_sequence.3} parent=11 // pred_check
        %p213 = pneg %p103
      $region22: #{rf_cell_sequence.3} parent=11 // pred_check_branch
        %215 = sbr.rel (%p213) target = $region24
      $region23: #{rf_cell_sequence.3} parent=11 // pred_region
        _
      $region24: #{rf_cell_sequence.3} parent=11 // pred_fallthru
        _
      // Predicated region
      $region25: #{rf_cell_sequence.3} parent=11 // pred_check
        %p216 = pneg %p124
      $region26: #{rf_cell_sequence.3} parent=11 // pred_check_branch
        %218 = sbr.rel (%p216) target = $region28
      $region27: #{rf_cell_sequence.3} parent=11 // pred_region
        _
      $region28: #{rf_cell_sequence.3} parent=11 // pred_fallthru
        _
    $region12: #{rf_cell_sequence.3} parent=5 // pred_fallthru
      _
    %p219 = scmp.lt.s32.totalorder %s14, 8
    // Predicated region
    $region29: #{rf_cell_sequence.3} parent=5 // pred_check
      %p220 = pneg %p219
    $region30: #{rf_cell_sequence.3} parent=5 // pred_check_branch
      %222 = sbr.rel (%p220) target = $region32
    $region31: #{rf_cell_sequence.3} parent=5 // pred_region
      // Predicated region
      $region33: #{rf_cell_sequence.3} parent=31 // pred_check
        %p223 = pneg %p34
      $region34: #{rf_cell_sequence.3} parent=31 // pred_check_branch
        %225 = sbr.rel (%p223) target = $region36
      $region35: #{rf_cell_sequence.3} parent=31 // pred_region
        %s226 = smul.u32 2, %s14
        %p227 = scmp.lt.s32.totalorder %s226, 15
        %s228 = scalar_select %p227, %s226, 15
        %s229 = smul.addr %s228, 8
        %s230 = scalar_lea.vmem %s0, %s229
        %s231 = smul.u32 2, %s14
      $region36: #{rf_cell_sequence.3} parent=31 // pred_fallthru
        _
    $region32: #{rf_cell_sequence.3} parent=5 // pred_fallthru
      _
    %p232 = scmp.le.s32.totalorder 1, %s14
    %p233 = scmp.lt.s32.totalorder %s14, 9
    %p234 = pnand %p232, %p233
    %p235 = pneg %p234
    // Predicated region
    $region37: #{rf_cell_sequence.3} parent=5 // pred_check
      _
    $region38: #{rf_cell_sequence.3} parent=5 // pred_check_branch
      %237 = sbr.rel (%p234) target = $region40
    $region39: #{rf_cell_sequence.3} parent=5 // pred_region
      %s238 = ssub.s32 %s14, 1
      %s239 = smul.u32 2, %s19
      %p240 = scmp.lt.s32.totalorder %s239, 15
      %s241 = scalar_select %p240, %s239, 15
      %s242 = smul.addr %s241, 8
      %s243 = scalar_lea.vmem %s0, %s242
      %p244 = pneg %p40
      %p245 = pneg %p37
      %p246 = pneg %p61
      %p247 = pneg %p58
      %p248 = pneg %p82
      %p249 = pneg %p79
      %p250 = pneg %p103
      %p251 = pneg %p100
      %p252 = pneg %p124
      %p253 = pneg %p121
      %p254 = pneg %p150
      %p255 = pneg %p147
      %s256 = smul.u32 2, %s19
      %p257 = scmp.lt.s32.totalorder %s256, 15
      %s258 = scalar_select %p257, %s256, 15
      %s259 = smul.addr %s258, 4
      %s260 = scalar_lea.vmem %s5, %s259
      %p261 = pneg %p171
      %p262 = pneg %p168
      %p263 = pneg %p192
      %p264 = pneg %p189
      %s265 = smul.u32 2, %s19
      %p266 = scmp.lt.s32.totalorder %s265, 15
      %s267 = scalar_select %p266, %s265, 15
      %s268 = smul.addr %s267, 8
      %s269 = scalar_lea.vmem %s0, %s268
      %s270 = smul.u32 2, %s19
      %s271 = smul.u32 2, %s19
      %p272 = scmp.lt.s32.totalorder %s271, 15
      %s273 = scalar_select %p272, %s271, 15
      %s274 = smul.addr %s273, 4
      %s275 = scalar_lea.vmem %s5, %s274
      %s276 = smul.u32 2, %s19
      %p277 = scmp.eq.s32.totalorder %s19, 0
      // Predicated region
      $region41: #{rf_cell_sequence.3} parent=39 // pred_check
        %p278 = pneg %p277
      $region42: #{rf_cell_sequence.3} parent=39 // pred_check_branch
        %280 = sbr.rel (%p278) target = $region44
      $region43: #{rf_cell_sequence.3} parent=39 // pred_region
        %v281 = vld [vmem:[%s1] sm:$0xff]
        %v282 = vld [vmem:[%s1 + $0x8] sm:$0xff]
        %283 = vst [vmem:[%s6] sm:$0xff] %v281
        %284 = vst [vmem:[%s6 + $0x8] sm:$0xff] %v282
        %v285 = vld [vmem:[%s2] sm:$0xff]
        %v286 = vld [vmem:[%s2 + $0x8] sm:$0xff]
        %287 = vst [vmem:[%s7] sm:$0xff] %v285
        %288 = vst [vmem:[%s7 + $0x8] sm:$0xff] %v286
      $region44: #{rf_cell_sequence.3} parent=39 // pred_fallthru
        _
      %v289 = vld [vmem:[%s6] sm:$0xff]
      %v290 = vld [vmem:[%s6 + $0x8] sm:$0xff]
      %v291 = vld [vmem:[%s7] sm:$0xff]
      %v292 = vld [vmem:[%s7 + $0x8] sm:$0xff]
      %v293 = vld [vmem:[%s3] sm:$0x1]
      %v294 = vld [vmem:[%s4] sm:$0x1]
      %v295 = vld [vmem:[%s269] sm:$0xff]
      %v296 = vld [vmem:[%s269 + $0x8] sm:$0xff]
      %v298 = vperm.slane %v294, 0
      %v300 = vadd.f32 %v289, %v298
      %v301 = vadd.f32 %v290, %v298
      %v302 = vadd.f32 %v300, %v295
      %v303 = vadd.f32 %v301, %v296
      %v305 = vperm.slane %v293, 0
      %v307 = vmul.f32 %v305, %v291
      %v308 = vmul.f32 %v305, %v292
      %v309 = vsub.f32 %v302, %v307
      %v310 = vsub.f32 %v303, %v308
      %v311 = vmul.f32 %v305, %v289
      %v312 = vmul.f32 %v305, %v290
      %v313 = vadd.f32 %v291, %v311
      %v314 = vadd.f32 %v292, %v312
      %v315 = vadd.f32 %v313, %v298
      %v316 = vadd.f32 %v314, %v298
      %vm317 = vcmp.gt.f32.partialorder %v309, 1.0
      %vm318 = vcmp.gt.f32.partialorder %v310, 1.0
      %v319 = vsel %vm317, 1.0, 0.0
      %v320 = vsel %vm318, 1.0, 0.0
      %v321 = vpack.c.bf16 %v319, %v319
      %v322 = vpack.c.bf16 %v320, %v320
      %323 = vst [vmem:[%s275] sm:$0xf] %v321
      %324 = vst [vmem:[%s275 + $0x4] sm:$0xf] %v322
      %325 = vst [vmem:[%s6] sm:$0xff] %v309
      %326 = vst [vmem:[%s6 + $0x8] sm:$0xff] %v310
      %327 = vst [vmem:[%s7] sm:$0xff] %v315
      %328 = vst [vmem:[%s7 + $0x8] sm:$0xff] %v316
      %s329 = smul.u32 2, %s19
      %p330 = scmp.lt.s32.totalorder %s329, 15
      %s331 = scalar_select %p330, %s329, 15
      %s332 = smul.addr %s331, 4
      %s333 = scalar_lea.vmem %s5, %s332
      // Predicated region
      $region45: #{rf_cell_sequence.3} parent=39 // pred_check
        %p334 = pneg %p147
      $region46: #{rf_cell_sequence.3} parent=39 // pred_check_branch
        %336 = sbr.rel (%p334) target = $region48
      $region47: #{rf_cell_sequence.3} parent=39 // pred_region
        %s337 = smul.u32 2, %s19
      $region48: #{rf_cell_sequence.3} parent=39 // pred_fallthru
        _
      // Predicated region
      $region49: #{rf_cell_sequence.3} parent=39 // pred_check
        %p338 = pneg %p168
      $region50: #{rf_cell_sequence.3} parent=39 // pred_check_branch
        %340 = sbr.rel (%p338) target = $region52
      $region51: #{rf_cell_sequence.3} parent=39 // pred_region
        _
      $region52: #{rf_cell_sequence.3} parent=39 // pred_fallthru
        _
      // Predicated region
      $region53: #{rf_cell_sequence.3} parent=39 // pred_check
        %p341 = pneg %p189
      $region54: #{rf_cell_sequence.3} parent=39 // pred_check_branch
        %343 = sbr.rel (%p341) target = $region56
      $region55: #{rf_cell_sequence.3} parent=39 // pred_region
        _
      $region56: #{rf_cell_sequence.3} parent=39 // pred_fallthru
        _
      // Predicated region
      $region57: #{rf_cell_sequence.3} parent=39 // pred_check
        %p344 = pneg %p168
      $region58: #{rf_cell_sequence.3} parent=39 // pred_check_branch
        %346 = sbr.rel (%p344) target = $region60
      $region59: #{rf_cell_sequence.3} parent=39 // pred_region
        _
      $region60: #{rf_cell_sequence.3} parent=39 // pred_fallthru
        _
      // Predicated region
      $region61: #{rf_cell_sequence.3} parent=39 // pred_check
        %p347 = pneg %p189
      $region62: #{rf_cell_sequence.3} parent=39 // pred_check_branch
        %349 = sbr.rel (%p347) target = $region64
      $region63: #{rf_cell_sequence.3} parent=39 // pred_region
        _
      $region64: #{rf_cell_sequence.3} parent=39 // pred_fallthru
        _
    $region40: #{rf_cell_sequence.3} parent=5 // pred_fallthru
      _
    %p350 = scmp.le.s32.totalorder 2, %s14
    // Predicated region
    $region65: #{rf_cell_sequence.3} parent=5 // pred_check
      %p351 = pneg %p350
    $region66: #{rf_cell_sequence.3} parent=5 // pred_check_branch
      %353 = sbr.rel (%p351) target = $region68
    $region67: #{rf_cell_sequence.3} parent=5 // pred_region
      %s354 = ssub.s32 %s14, 2
      // Predicated region
      $region69: #{rf_cell_sequence.3} parent=67 // pred_check
        %p355 = pneg %p153
      $region70: #{rf_cell_sequence.3} parent=67 // pred_check_branch
        %357 = sbr.rel (%p355) target = $region72
      $region71: #{rf_cell_sequence.3} parent=67 // pred_region
        %s358 = smul.u32 2, %s20
        %p359 = scmp.lt.s32.totalorder %s358, 15
        %s360 = scalar_select %p359, %s358, 15
        %s361 = smul.addr %s360, 4
        %s362 = scalar_lea.vmem %s5, %s361
      $region72: #{rf_cell_sequence.3} parent=67 // pred_fallthru
        _
    $region68: #{rf_cell_sequence.3} parent=5 // pred_fallthru
      _
  $region6: #{rf_cell_sequence.3} parent=0 // loop_footer
    %s18 = sadd.s32 1, %s14
  $region7: #{rf_cell_sequence.3} parent=0 // loop_footer_branch
    %13 = sbr.rel target = $region3
  $region8: #{rf_cell_sequence.3} parent=0 // loop_exit
    _

// kernel: rf_cell_sequence.2
$region0: #{rf_cell_sequence.2}
  #allocation0 [shape = 'u32[]', space=smem, size = 0x4, offset = 0x4, fixed_abs, tag = 'smem constant byte address 0x4 - core index']
  #allocation1 [shape = 'u32[72,128]{1,0:T(1,128)}', space=vmem, size = 0x9000, scoped, tag = 'internal scratch']
  %s0 = inlined_call_operand.vmem [shape: bf16[128,32], index: 0, kind: input, shape index: {}]
  %s1 = inlined_call_operand.vmem [shape: bf16[32,128], index: 1, kind: input, shape index: {}]
  %s2 = inlined_call_operand.vmem [shape: f32[128,128], index: 2, kind: output, shape index: {}]
  %s3 = sld [smem:[#allocation0]]
  $region18: #{rf_cell_sequence.2} parent=0
    _
  %s5 = ssub.s32 1, %s3
  %s6 = scalar_select 0, %s5, %s3
  // Predicated region
  $region2: #{rf_cell_sequence.2} parent=0 // pred_check
    _
  $region3: #{rf_cell_sequence.2} parent=0 // pred_check_branch
    %8 = sbr.rel (0) target = $region5
  $region4: #{rf_cell_sequence.2} parent=0 // pred_region
    _
  $region5: #{rf_cell_sequence.2} parent=0 // pred_fallthru
    _
  // Predicated region
  $region6: #{rf_cell_sequence.2} parent=0 // pred_check
    _
  $region7: #{rf_cell_sequence.2} parent=0 // pred_check_branch
    %10 = sbr.rel (0) target = $region9
  $region8: #{rf_cell_sequence.2} parent=0 // pred_region
    _
  $region9: #{rf_cell_sequence.2} parent=0 // pred_fallthru
    _
  %v12 = vld [vmem:[%s0] sm:$0xf]
  %v13 = vld [vmem:[%s0 + $0x4] sm:$0xf]
  %v14 = vld [vmem:[%s0 + $0x8] sm:$0xf]
  %v15 = vld [vmem:[%s0 + $0xc] sm:$0xf]
  %v16 = vld [vmem:[%s0 + $0x10] sm:$0xf]
  %v17 = vld [vmem:[%s0 + $0x14] sm:$0xf]
  %v18 = vld [vmem:[%s0 + $0x18] sm:$0xf]
  %v19 = vld [vmem:[%s0 + $0x1c] sm:$0xf]
  %v20 = vld [vmem:[%s0 + $0x20] sm:$0xf]
  %v21 = vld [vmem:[%s0 + $0x24] sm:$0xf]
  %v22 = vld [vmem:[%s0 + $0x28] sm:$0xf]
  %v23 = vld [vmem:[%s0 + $0x2c] sm:$0xf]
  %v24 = vld [vmem:[%s0 + $0x30] sm:$0xf]
  %v25 = vld [vmem:[%s0 + $0x34] sm:$0xf]
  %v26 = vld [vmem:[%s0 + $0x38] sm:$0xf]
  %v27 = vld [vmem:[%s0 + $0x3c] sm:$0xf]
  %v28 = vld [vmem:[%s1] sm:$0xf]
  %v29 = vld [vmem:[%s1 + $0x4] sm:$0xf]
  %v30 = vld [vmem:[%s1 + $0x8] sm:$0xf]
  %v31 = vld [vmem:[%s1 + $0xc] sm:$0xf]
  %v48 = vunpack.c.l.b16 %v12
  %v49 = vunpack.c.l.b16 %v13
  %v50 = vunpack.c.l.b16 %v14
  %v51 = vunpack.c.l.b16 %v15
  %v52 = vunpack.c.l.b16 %v16
  %v53 = vunpack.c.l.b16 %v17
  %v54 = vunpack.c.l.b16 %v18
  %v55 = vunpack.c.l.b16 %v19
  %v56 = vunpack.c.l.b16 %v20
  %v57 = vunpack.c.l.b16 %v21
  %v58 = vunpack.c.l.b16 %v22
  %v59 = vunpack.c.l.b16 %v23
  %v60 = vunpack.c.l.b16 %v24
  %v61 = vunpack.c.l.b16 %v25
  %v62 = vunpack.c.l.b16 %v26
  %v63 = vunpack.c.l.b16 %v27
  %v64 = vpack.c.b16 %v49, %v48
  %v65 = vpack.c.b16 %v51, %v50
  %v66 = vpack.c.b16 %v53, %v52
  %v67 = vpack.c.b16 %v55, %v54
  %v68 = vpack.c.b16 %v57, %v56
  %v69 = vpack.c.b16 %v59, %v58
  %v70 = vpack.c.b16 %v61, %v60
  %v71 = vpack.c.b16 %v63, %v62
  %v76 = vunpack.c.l.b16 %v28
  %v77 = vunpack.c.l.b16 %v29
  %v78 = vunpack.c.l.b16 %v30
  %v79 = vunpack.c.l.b16 %v31
  %v80 = vpack.c.b16 %v77, %v76
  %v81 = vpack.c.b16 %v79, %v78
  %vm84 = vcmask 261120
  %v86 = vsel %vm84, %v64, 0
  %v89 = vsel %vm84, %v65, 0
  %v92 = vsel %vm84, %v66, 0
  %v95 = vsel %vm84, %v67, 0
  %v98 = vsel %vm84, %v68, 0
  %v101 = vsel %vm84, %v69, 0
  %v104 = vsel %vm84, %v70, 0
  %v107 = vsel %vm84, %v71, 0
  %109 = vmatpush.bf16.msra.mxu0 0
  %110 = vmatpush.bf16.msra.mxu0 0
  %111 = vmatpush.bf16.msra.mxu0 0
  %112 = vmatpush.bf16.msra.mxu0 0
  %113 = vmatpush.bf16.msra.mxu0 0
  %114 = vmatpush.bf16.msra.mxu0 0
  %115 = vmatpush.bf16.msra.mxu0 %v81
  %116 = vmatpush.bf16.msra.mxu0 %v80
  %117 = vmatmul.bf16.gmra.mxu0 %v86
  %v118 = vpop.f32.mrf.mxu0
  %v119 = vadd.f32 0.0, %v118
  %v120 = vpop.f32.mrf.mxu0
  %v121 = vadd.f32 0.0, %v120
  %122 = vmatmul.bf16.gmra.mxu0 %v89
  %v123 = vpop.f32.mrf.mxu0
  %v124 = vadd.f32 0.0, %v123
  %v125 = vpop.f32.mrf.mxu0
  %v126 = vadd.f32 0.0, %v125
  %127 = vmatmul.bf16.gmra.mxu0 %v92
  %v128 = vpop.f32.mrf.mxu0
  %v129 = vadd.f32 0.0, %v128
  %v130 = vpop.f32.mrf.mxu0
  %v131 = vadd.f32 0.0, %v130
  %132 = vmatmul.bf16.gmra.mxu0 %v95
  %v133 = vpop.f32.mrf.mxu0
  %v134 = vadd.f32 0.0, %v133
  %v135 = vpop.f32.mrf.mxu0
  %v136 = vadd.f32 0.0, %v135
  %137 = vmatmul.bf16.gmra.mxu0 %v98
  %v138 = vpop.f32.mrf.mxu0
  %v139 = vadd.f32 0.0, %v138
  %v140 = vpop.f32.mrf.mxu0
  %v141 = vadd.f32 0.0, %v140
  %142 = vmatmul.bf16.gmra.mxu0 %v101
  %v143 = vpop.f32.mrf.mxu0
  %v144 = vadd.f32 0.0, %v143
  %v145 = vpop.f32.mrf.mxu0
  %v146 = vadd.f32 0.0, %v145
  %147 = vmatmul.bf16.gmra.mxu0 %v104
  %v148 = vpop.f32.mrf.mxu0
  %v149 = vadd.f32 0.0, %v148
  %v150 = vpop.f32.mrf.mxu0
  %v151 = vadd.f32 0.0, %v150
  %152 = vmatmul.bf16.gmra.mxu0 %v107
  %v153 = vpop.f32.mrf.mxu0
  %v154 = vadd.f32 0.0, %v153
  %v155 = vpop.f32.mrf.mxu0
  %v156 = vadd.f32 0.0, %v155
  %157 = vdwg.mxu0
  %v158 = vmul.f32 %v119, 0.01
  %v159 = vmul.f32 %v121, 0.01
  %v160 = vmul.f32 %v124, 0.01
  %v161 = vmul.f32 %v126, 0.01
  %v162 = vmul.f32 %v129, 0.01
  %v163 = vmul.f32 %v131, 0.01
  %v164 = vmul.f32 %v134, 0.01
  %v165 = vmul.f32 %v136, 0.01
  %v166 = vmul.f32 %v139, 0.01
  %v167 = vmul.f32 %v141, 0.01
  %v168 = vmul.f32 %v144, 0.01
  %v169 = vmul.f32 %v146, 0.01
  %v170 = vmul.f32 %v149, 0.01
  %v171 = vmul.f32 %v151, 0.01
  %v172 = vmul.f32 %v154, 0.01
  %v173 = vmul.f32 %v156, 0.01
  %174 = vst [vmem:[%s2] sm:$0xff] %v158
  %175 = vst [vmem:[%s2 + $0x8] sm:$0xff] %v159
  %176 = vst [vmem:[%s2 + $0x10] sm:$0xff] %v160
  %177 = vst [vmem:[%s2 + $0x18] sm:$0xff] %v161
  %178 = vst [vmem:[%s2 + $0x20] sm:$0xff] %v162
  %179 = vst [vmem:[%s2 + $0x28] sm:$0xff] %v163
  %180 = vst [vmem:[%s2 + $0x30] sm:$0xff] %v164
  %181 = vst [vmem:[%s2 + $0x38] sm:$0xff] %v165
  %182 = vst [vmem:[%s2 + $0x40] sm:$0xff] %v166
  %183 = vst [vmem:[%s2 + $0x48] sm:$0xff] %v167
  %184 = vst [vmem:[%s2 + $0x50] sm:$0xff] %v168
  %185 = vst [vmem:[%s2 + $0x58] sm:$0xff] %v169
  %186 = vst [vmem:[%s2 + $0x60] sm:$0xff] %v170
  %187 = vst [vmem:[%s2 + $0x68] sm:$0xff] %v171
  %188 = vst [vmem:[%s2 + $0x70] sm:$0xff] %v172
  %189 = vst [vmem:[%s2 + $0x78] sm:$0xff] %v173
  // Predicated region
  $region10: #{rf_cell_sequence.2} parent=0 // pred_check
    _
  $region11: #{rf_cell_sequence.2} parent=0 // pred_check_branch
    %191 = sbr.rel (0) target = $region13
  $region12: #{rf_cell_sequence.2} parent=0 // pred_region
    _
  $region13: #{rf_cell_sequence.2} parent=0 // pred_fallthru
    _
  // Predicated region
  $region14: #{rf_cell_sequence.2} parent=0 // pred_check
    _
  $region15: #{rf_cell_sequence.2} parent=0 // pred_check_branch
    %193 = sbr.rel (0) target = $region17
  $region16: #{rf_cell_sequence.2} parent=0 // pred_region
    _
  $region17: #{rf_cell_sequence.2} parent=0 // pred_fallthru
    _

</llo_original>
